<compile_context>
chip_gen: v5e
topology: v5e:2x2
jax: 0.10.0
libtpu: 0.0.40
codegen_flags: <defaults>
</compile_context>

<pallas_src>
import math
import functools

import jax
import jax.numpy as jnp
from jax import lax
from jax.experimental import pallas as pl
from jax.experimental.pallas import tpu as pltpu


# ---------------------------------------------------------------------------
# Tiled, K-accumulated linear projection over a stack of G weights.
# Operands arrive already in the compute dtype (bf16 on the fast path) so the
# DMAs are narrow; accumulation is f32; bias is added once in the epilogue.
# ---------------------------------------------------------------------------

def _proj_kernel(x_ref, w_ref, b_ref, o_ref, acc_ref):
    k = pl.program_id(3)

    @pl.when(k == 0)
    def _init():
        acc_ref[...] = jnp.zeros_like(acc_ref)

    acc_ref[...] += jnp.dot(x_ref[...], w_ref[...],
                            preferred_element_type=jnp.float32)

    @pl.when(k == pl.num_programs(3) - 1)
    def _finalize():
        o_ref[...] = (acc_ref[...] + b_ref[...]).astype(o_ref.dtype)


def pallas_projection(x2d, w_stack, b_stack, *, out_dtype,
                      tm_cap=256, tn_cap=512, tk_cap=512):
    """x2d: (M, K); w_stack: (G, K, N); b_stack: (G, 1, N) f32 -> (G, M, N) out_dtype."""
    M, K = x2d.shape
    G, K2, N = w_stack.shape
    assert K2 == K
    tm = M if M <= tm_cap else tm_cap
    tn = N if N <= tn_cap else tn_cap
    tk = K if K <= tk_cap else tk_cap
    # TODO(synk): arbitrary (non-divisible) B*S / hidden sizes need a padded edge tile.
    assert M % tm == 0 and N % tn == 0 and K % tk == 0, "tiling requires divisibility"

    in_bytes = jnp.dtype(x2d.dtype).itemsize
    out_bytes = jnp.dtype(out_dtype).itemsize
    cost = pl.CostEstimate(
        flops=2 * G * M * N * K,
        transcendentals=0,
        bytes_accessed=int(in_bytes * (G * (N // tn) * M * K + G * K * N)
                           + out_bytes * G * M * N),
    )
    return pl.pallas_call(
        _proj_kernel,
        out_shape=jax.ShapeDtypeStruct((G, M, N), out_dtype),
        grid=(G, M // tm, N // tn, K // tk),
        in_specs=[
            pl.BlockSpec((tm, tk), lambda g, m, n, k: (m, k)),
            pl.BlockSpec((None, tk, tn), lambda g, m, n, k: (g, k, n)),
            pl.BlockSpec((None, 1, tn), lambda g, m, n, k: (g, 0, n)),
        ],
        out_specs=pl.BlockSpec((None, tm, tn), lambda g, m, n, k: (g, m, n)),
        scratch_shapes=[pltpu.VMEM((tm, tn), jnp.float32)],
        compiler_params=pltpu.CompilerParams(
            dimension_semantics=("parallel", "parallel", "parallel", "arbitrary")),
        cost_estimate=cost,
    )(x2d, w_stack, b_stack)


# ---------------------------------------------------------------------------
# Flash-style attention: grid = (batch, q_tiles, kv_tiles), online softmax.
# ---------------------------------------------------------------------------

def _flash_attention_kernel(q_ref, k_ref, v_ref,
                            cosq_ref, sinaq_ref, sinbq_ref,
                            cosk_ref, sinak_ref, sinbk_ref,
                            o_ref, m_ref, l_ref, acc_ref, *,
                            num_heads, compute_dtype):
    ki = pl.program_id(2)

    @pl.when(ki == 0)
    def _init():
        m_ref[...] = jnp.full_like(m_ref, -jnp.inf)
        l_ref[...] = jnp.zeros_like(l_ref)
        acc_ref[...] = jnp.zeros_like(acc_ref)

    H = q_ref.shape[-1]
    Dh = H // num_heads
    half = Dh // 2

    def rope(x, cos, sin_a, sin_b):
        # Full lane-width RoPE.  sin_a / sin_b are zero-masked so that the head-boundary
        # wrap of the whole-row rotation is harmless; sign and Dh^-1/4 scale are folded
        # into the tables (applied to BOTH q and k => q.k picks up the full 1/sqrt(Dh)).
        xf = x.astype(jnp.float32)
        if H % 128 == 0:
            r_neg = pltpu.roll(xf, H - half, 1)   # per-head x[:, j+half]   (XLU slot)
            r_pos = pltpu.roll(xf, half, 1)       # per-head x[:, j-half]   (XLU slot)
        else:
            # lane dim not a multiple of 128: full-width concat fallback
            r_neg = jnp.concatenate([xf[:, half:], xf[:, :half]], axis=1)
            r_pos = jnp.concatenate([xf[:, H - half:], xf[:, :H - half]], axis=1)
        return xf * cos + r_neg * sin_a + r_pos * sin_b

    q = rope(q_ref[...], cosq_ref[...], sinaq_ref[...], sinbq_ref[...]).astype(compute_dtype)
    k = rope(k_ref[...], cosk_ref[...], sinak_ref[...], sinbk_ref[...]).astype(compute_dtype)
    v = v_ref[...].astype(compute_dtype)

    # TODO(synk): for >= 8 heads switch this static unroll to lax.fori_loop (or a head
    # grid axis) to bound live ranges and compile time.
    for h in range(num_heads):
        sl = slice(h * Dh, (h + 1) * Dh)
        # q @ k^T without materializing a transposed copy of k
        s = lax.dot_general(q[:, sl], k[:, sl], (((1,), (1,)), ((), ())),
                            preferred_element_type=jnp.float32)       # (tq, tkv) f32
        m_prev = m_ref[h]                                             # (tq, 1)
        m_new = jnp.maximum(m_prev, jnp.max(s, axis=-1, keepdims=True))
        alpha = jnp.exp(m_prev - m_new)
        # TODO(synk): on v6e/v7x the exp argument could be cast to bf16 (bf16 EUP);
        # kept in f32 so the same kernel stays correct/fast on v5e.
        p = jnp.exp(s - m_new)
        l_ref[h] = alpha * l_ref[h] + jnp.sum(p, axis=-1, keepdims=True)
        acc_ref[:, sl] = alpha * acc_ref[:, sl] + jnp.dot(
            p.astype(compute_dtype), v[:, sl], preferred_element_type=jnp.float32)
        m_ref[h] = m_new

    @pl.when(ki == pl.num_programs(2) - 1)
    def _finalize():
        approx = compute_dtype != jnp.float32
        # Deferred normalization: divide the (tq, Dh) accumulator, not the (tq, tkv) p.
        for h in range(num_heads):
            sl = slice(h * Dh, (h + 1) * Dh)
            acc_ref[:, sl] = acc_ref[:, sl] * pl.reciprocal(l_ref[h], approx=approx)
        # One lane-dense (tq, H) store, heads laid out exactly as out_proj expects.
        o_ref[...] = acc_ref[...].astype(o_ref.dtype)
        # TODO(synk): nn.Dropout(attention_dropout) omitted (inference/eval semantics).


def pallas_attention(qkv, cos_t, sin_a, sin_b, *, batch, seq, num_heads,
                     compute_dtype, out_dtype, tq_cap=256, tkv_cap=256):
    """qkv: (3, B*S, H) compute_dtype; cos/sin tables: (S, H) f32 -> (B*S, H) out_dtype."""
    _, BS, H = qkv.shape
    assert BS == batch * seq
    tq = seq if seq <= tq_cap else tq_cap
    tkv = seq if seq <= tkv_cap else tkv_cap
    assert seq % tq == 0 and seq % tkv == 0
    nqt, nkt = seq // tq, seq // tkv

    kernel = functools.partial(_flash_attention_kernel,
                               num_heads=num_heads, compute_dtype=compute_dtype)

    q_spec = pl.BlockSpec((None, tq, H), lambda b, qi, ki: (0, b * nqt + qi, 0))
    k_spec = pl.BlockSpec((None, tkv, H), lambda b, qi, ki: (1, b * nkt + ki, 0))
    v_spec = pl.BlockSpec((None, tkv, H), lambda b, qi, ki: (2, b * nkt + ki, 0))
    tq_spec = pl.BlockSpec((tq, H), lambda b, qi, ki: (qi, 0))
    tk_spec = pl.BlockSpec((tkv, H), lambda b, qi, ki: (ki, 0))

    in_bytes = jnp.dtype(qkv.dtype).itemsize
    cost = pl.CostEstimate(
        flops=4 * batch * seq * seq * H,
        transcendentals=batch * num_heads * seq * seq,
        bytes_accessed=int(in_bytes * 3 * BS * H
                           + jnp.dtype(out_dtype).itemsize * BS * H
                           + 4 * 3 * seq * H),
    )

    return pl.pallas_call(
        kernel,
        out_shape=jax.ShapeDtypeStruct((BS, H), out_dtype),
        grid=(batch, nqt, nkt),
        in_specs=[q_spec, k_spec, v_spec,
                  tq_spec, tq_spec, tq_spec,
                  tk_spec, tk_spec, tk_spec],
        out_specs=pl.BlockSpec((tq, H), lambda b, qi, ki: (b * nqt + qi, 0)),
        scratch_shapes=[
            pltpu.VMEM((num_heads, tq, 1), jnp.float32),   # running max m
            pltpu.VMEM((num_heads, tq, 1), jnp.float32),   # running sum l
            pltpu.VMEM((tq, H), jnp.float32),              # output accumulator
        ],
        compiler_params=pltpu.CompilerParams(
            dimension_semantics=("parallel", "parallel", "arbitrary")),
        cost_estimate=cost,
    )(qkv, qkv, qkv, cos_t, sin_a, sin_b, cos_t, sin_a, sin_b)


# ---------------------------------------------------------------------------
# RoPE tables (pre-tiled to (S, H), sign + Dh^-1/4 scale folded) and params.
# ---------------------------------------------------------------------------

def rope_tables(seq_len, head_dim, num_heads):
    half = head_dim // 2
    inv_freq = 1.0 / (10000.0 ** (jnp.arange(0, head_dim, 2, dtype=jnp.float32) / head_dim))
    t = jnp.arange(seq_len, dtype=jnp.float32)
    freqs = jnp.einsum("i,j->ij", t, inv_freq)                 # (S, Dh/2)
    cos = jnp.cos(jnp.concatenate([freqs, freqs], axis=-1))    # (S, Dh)
    sin_h = jnp.sin(freqs)                                     # (S, Dh/2)
    zeros = jnp.zeros_like(sin_h)
    sin_a = jnp.concatenate([-sin_h, zeros], axis=-1)          # multiplies roll(x, -half)
    sin_b = jnp.concatenate([zeros, sin_h], axis=-1)           # multiplies roll(x, +half)
    c = float(head_dim) ** -0.25                               # sqrt of 1/sqrt(Dh); on q AND k
    tile = lambda a: jnp.tile(a, (1, num_heads)) * c
    return tile(cos), tile(sin_a), tile(sin_b)


def init_params(key, hidden_size):
    keys = jax.random.split(key, 8)
    bound = 1.0 / math.sqrt(hidden_size)

    def linear_init(kw, kb):
        # stored as (in, out) == PyTorch weight.T; bias as (1, out)
        w = jax.random.uniform(kw, (hidden_size, hidden_size), jnp.float32, -bound, bound)
        b = jax.random.uniform(kb, (1, hidden_size), jnp.float32, -bound, bound)
        return w, b

    wq, bq = linear_init(keys[0], keys[1])
    wk, bk = linear_init(keys[2], keys[3])
    wv, bv = linear_init(keys[4], keys[5])
    wo, bo = linear_init(keys[6], keys[7])
    return dict(wq=wq, bq=bq, wk=wk, bk=bk, wv=wv, bv=bv, wo=wo, bo=bo)


# ---------------------------------------------------------------------------
# Forward pass (Pallas) and a pure-JAX reference for validation
# ---------------------------------------------------------------------------

def efficient_attention_forward(params, hidden_states, num_heads,
                                compute_dtype=jnp.bfloat16):
    B, S, H = hidden_states.shape
    Dh = H // num_heads
    assert Dh % 2 == 0
    x2d = hidden_states.reshape(B * S, H).astype(compute_dtype)

    # Fused QKV: one tiled pallas_call over a (3, H, H) weight stack (bf16 operands).
    w_qkv = jnp.stack([params["wq"], params["wk"], params["wv"]], 0).astype(compute_dtype)
    b_qkv = jnp.stack([params["bq"], params["bk"], params["bv"]], 0)            # f32 epilogue add
    qkv = pallas_projection(x2d, w_qkv, b_qkv, out_dtype=compute_dtype)          # (3, B*S, H)

    cos_t, sin_a, sin_b = rope_tables(S, Dh, num_heads)                          # (S, H) f32

    attn = pallas_attention(qkv, cos_t, sin_a, sin_b, batch=B, seq=S,
                            num_heads=num_heads, compute_dtype=compute_dtype,
                            out_dtype=compute_dtype)                             # (B*S, H)

    out = pallas_projection(attn, params["wo"][None].astype(compute_dtype),
                            params["bo"][None], out_dtype=jnp.float32)           # (1, B*S, H)
    return out.reshape(B, S, H)


def _ref_rope(seq_len, dim):
    inv_freq = 1.0 / (10000.0 ** (jnp.arange(0, dim, 2, dtype=jnp.float32) / dim))
    t = jnp.arange(seq_len, dtype=jnp.float32)
    freqs = jnp.einsum("i,j->ij", t, inv_freq)
    emb = jnp.concatenate([freqs, freqs], axis=-1)
    return jnp.cos(emb), jnp.sin(emb)


def reference_forward(params, hidden_states, num_heads):
    hi = lax.Precision.HIGHEST
    B, S, H = hidden_states.shape
    Dh = H // num_heads
    x2d = hidden_states.reshape(B * S, H)
    q = (jnp.dot(x2d, params["wq"], precision=hi) + params["bq"]).reshape(B, S, num_heads, Dh).transpose(0, 2, 1, 3)
    k = (jnp.dot(x2d, params["wk"], precision=hi) + params["bk"]).reshape(B, S, num_heads, Dh).transpose(0, 2, 1, 3)
    v = (jnp.dot(x2d, params["wv"], precision=hi) + params["bv"]).reshape(B, S, num_heads, Dh).transpose(0, 2, 1, 3)

    cos, sin = _ref_rope(S, Dh)

    def rot_half(t):
        t1, t2 = t[..., : Dh // 2], t[..., Dh // 2:]
        return jnp.concatenate([-t2, t1], axis=-1)

    qe = q * cos + rot_half(q) * sin
    ke = k * cos + rot_half(k) * sin
    s = jnp.einsum("bhqd,bhkd->bhqk", qe, ke, precision=hi) / math.sqrt(Dh)
    p = jax.nn.softmax(s, axis=-1)
    o = jnp.einsum("bhqk,bhkd->bhqd", p, v, precision=hi)
    o = jnp.dot(o.transpose(0, 2, 1, 3).reshape(B * S, H), params["wo"], precision=hi) + params["bo"]
    return o.reshape(B, S, H)


# ---------------------------------------------------------------------------
# Main
# ---------------------------------------------------------------------------

if __name__ == "__main__":
    # Small config: hidden=128, heads=4 (head_dim=32), batch=2, seq=8.
    batch, seq, hidden, num_heads = 2, 8, 128, 4

    key = jax.random.PRNGKey(0)
    k_params, k_input = jax.random.split(key)
    params = init_params(k_params, hidden)
    hidden_states = jax.random.normal(k_input, (batch, seq, hidden), dtype=jnp.float32)

    ref = reference_forward(params, hidden_states, num_heads)

    # Full-f32 compute path: tight check against the pure-JAX reference.
    out_f32 = efficient_attention_forward(params, hidden_states, num_heads,
                                          compute_dtype=jnp.float32)
    out_f32 = jax.block_until_ready(out_f32)
    assert out_f32.shape == (batch, seq, hidden)
    assert jnp.allclose(out_f32, ref, rtol=2e-3, atol=2e-3), \
        "Pallas (f32) output mismatch vs JAX reference"

    # bf16 MXU fast path (production default): loose tolerance check.
    out_bf16 = efficient_attention_forward(params, hidden_states, num_heads,
                                           compute_dtype=jnp.bfloat16)
    out_bf16 = jax.block_until_ready(out_bf16)
    assert out_bf16.shape == (batch, seq, hidden)
    assert jnp.allclose(out_bf16, ref, rtol=5e-2, atol=5e-2), \
        "Pallas (bf16) output mismatch vs JAX reference"

    print("KERNEL_OK")
</pallas_src>

<mosaic_0001>
module attributes {stable_mosaic.version = 11 : i64} {
  func.func @_proj_kernel(%arg0: i32, %arg1: i32, %arg2: i32, %arg3: i32, %arg4: memref<16x128xf32, #tpu.memory_space<vmem>>, %arg5: memref<1x128x128xf32, #tpu.memory_space<vmem>>, %arg6: memref<1x1x128xf32, #tpu.memory_space<vmem>>, %arg7: memref<1x16x128xf32, #tpu.memory_space<vmem>>, %arg8: memref<16x128xf32, #tpu.memory_space<vmem>>) attributes {dimension_semantics = [#tpu.dimension_semantics<parallel>, #tpu.dimension_semantics<parallel>, #tpu.dimension_semantics<parallel>, #tpu.dimension_semantics<arbitrary>], iteration_bounds = array<i64: 3, 1, 1, 1>, scalar_prefetch = 0 : i64, scratch_operands = 1 : i64, tpu.core_type = #tpu.core_type<tc>, window_params = [{transform_indices = @transform_0, window_bounds = array<i64: 16, 128>}, {transform_indices = @transform_1, window_bounds = array<i64: 1, 128, 128>}, {transform_indices = @transform_2, window_bounds = array<i64: 1, 1, 128>}, {transform_indices = @transform_3, window_bounds = array<i64: 1, 16, 128>}]} {
    %c0_i32 = arith.constant 0 : i32
    %0 = arith.cmpi eq, %arg3, %c0_i32 : i32
    %1 = arith.extui %0 : i1 to i32
    %c0_i32_0 = arith.constant 0 : i32
    %2 = arith.cmpi ne, %1, %c0_i32_0 : i32
    scf.if %2 {
      %cst_11 = arith.constant 0.000000e+00 : f32
      %13 = vector.broadcast %cst_11 : f32 to vector<16x128xf32>
      %c0_12 = arith.constant 0 : index
      %c0_13 = arith.constant 0 : index
      %14 = vector.load %arg8[%c0_12, %c0_13] : memref<16x128xf32, #tpu.memory_space<vmem>>, vector<16x128xf32>
      tpu.vector_store %arg8[%c0_12, %c0_13], %13 {strides = array<i32>} : memref<16x128xf32, #tpu.memory_space<vmem>>, vector<16x128xf32>,
    } else {
    }
    %c0 = arith.constant 0 : index
    %c0_1 = arith.constant 0 : index
    %3 = vector.load %arg8[%c0, %c0_1] : memref<16x128xf32, #tpu.memory_space<vmem>>, vector<16x128xf32>
    %c0_2 = arith.constant 0 : index
    %c0_3 = arith.constant 0 : index
    %4 = vector.load %arg4[%c0_2, %c0_3] : memref<16x128xf32, #tpu.memory_space<vmem>>, vector<16x128xf32>
    %c0_4 = arith.constant 0 : index
    %c0_5 = arith.constant 0 : index
    %c0_6 = arith.constant 0 : index
    %5 = vector.load %arg5[%c0_4, %c0_5, %c0_6] : memref<1x128x128xf32, #tpu.memory_space<vmem>>, vector<1x128x128xf32>
    %6 = vector.shape_cast %5 : vector<1x128x128xf32> to vector<128x128xf32>
    %cst = arith.constant dense<0.000000e+00> : vector<16x128xf32>
    %7 = tpu.matmul %4, %6, %cst {dimension_numbers = #tpu.dot_dimension_numbers<[1], [0], [0], [1], [0, 0, 1, 1], [], []>} : vector<16x128xf32>, vector<128x128xf32>, vector<16x128xf32> -> vector<16x128xf32>
    %8 = arith.addf %3, %7 : vector<16x128xf32>
    %c0_7 = arith.constant 0 : index
    %c0_8 = arith.constant 0 : index
    %9 = vector.load %arg8[%c0_7, %c0_8] : memref<16x128xf32, #tpu.memory_space<vmem>>, vector<16x128xf32>
    tpu.vector_store %arg8[%c0_7, %c0_8], %8 {strides = array<i32>} : memref<16x128xf32, #tpu.memory_space<vmem>>, vector<16x128xf32>,
    %c0_i32_9 = arith.constant 0 : i32
    %10 = arith.cmpi eq, %arg3, %c0_i32_9 : i32
    %11 = arith.extui %10 : i1 to i32
    %c0_i32_10 = arith.constant 0 : i32
    %12 = arith.cmpi ne, %11, %c0_i32_10 : i32
    scf.if %12 {
      %c0_11 = arith.constant 0 : index
      %c0_12 = arith.constant 0 : index
      %13 = vector.load %arg8[%c0_11, %c0_12] : memref<16x128xf32, #tpu.memory_space<vmem>>, vector<16x128xf32>
      %c0_13 = arith.constant 0 : index
      %c0_14 = arith.constant 0 : index
      %c0_15 = arith.constant 0 : index
      %14 = vector.load %arg6[%c0_13, %c0_14, %c0_15] : memref<1x1x128xf32, #tpu.memory_space<vmem>>, vector<1x1x128xf32>
      %15 = vector.shape_cast %14 : vector<1x1x128xf32> to vector<1x128xf32>
      %16 = vector.broadcast %15 : vector<1x128xf32> to vector<16x128xf32>
      %17 = arith.addf %13, %16 : vector<16x128xf32>
      %c0_16 = arith.constant 0 : index
      %c0_17 = arith.constant 0 : index
      %c0_18 = arith.constant 0 : index
      %18 = vector.load %arg7[%c0_16, %c0_17, %c0_18] : memref<1x16x128xf32, #tpu.memory_space<vmem>>, vector<1x16x128xf32>
      %19 = vector.shape_cast %18 : vector<1x16x128xf32> to vector<16x128xf32>
      %20 = vector.shape_cast %17 : vector<16x128xf32> to vector<1x16x128xf32>
      tpu.vector_store %arg7[%c0_16, %c0_17, %c0_18], %20 {strides = array<i32>} : memref<1x16x128xf32, #tpu.memory_space<vmem>>, vector<1x16x128xf32>,
    } else {
    }
    return
  }
  func.func @transform_0(%arg0: i32, %arg1: i32, %arg2: i32, %arg3: i32) -> (i32, i32) {
    %c0_i32 = arith.constant 0 : i32
    return %arg1, %arg3 : i32, i32
  }
  func.func @transform_1(%arg0: i32, %arg1: i32, %arg2: i32, %arg3: i32) -> (i32, i32, i32) {
    %c0_i32 = arith.constant 0 : i32
    return %arg0, %arg3, %arg2 : i32, i32, i32
  }
  func.func @transform_2(%arg0: i32, %arg1: i32, %arg2: i32, %arg3: i32) -> (i32, i32, i32) {
    %c0_i32 = arith.constant 0 : i32
    %c0_i32_0 = arith.constant 0 : i32
    return %arg0, %c0_i32, %arg2 : i32, i32, i32
  }
  func.func @transform_3(%arg0: i32, %arg1: i32, %arg2: i32, %arg3: i32) -> (i32, i32, i32) {
    %c0_i32 = arith.constant 0 : i32
    return %arg0, %arg1, %arg2 : i32, i32, i32
  }
}

</mosaic_0001>

<llo_original>
// kernel: tpu_custom_call.1
$region0: #{tpu_custom_call.1}
  #allocation0 [shape = 'u32[]', space=smem, size = 0x4, offset = 0x4, fixed_abs, tag = 'smem constant byte address 0x4 - core index']
  #allocation1 [shape = 'u32[72,128]{1,0:T(1,128)}', space=vmem, size = 0x9000, scoped, tag = 'internal scratch']
  #allocation2 [shape = 'f32[16,128]{1,0:T(8,128)}', space=vmem, size = 0x2000, scoped, tag = 'scratch operand']
  %s0 = inlined_call_operand.hbm [shape: f32[16,128], index: 0, kind: input, shape index: {}]
  %s1 = inlined_call_operand.hbm [shape: f32[3,128,128], index: 1, kind: input, shape index: {}]
  %s2 = inlined_call_operand.hbm [shape: f32[3,1,128], index: 2, kind: input, shape index: {}]
  %s3 = inlined_call_operand.hbm [shape: f32[3,16,128], index: 3, kind: output, shape index: {}]
  %s4 = sld [smem:[#allocation0]]
  $region65: #{tpu_custom_call.1} parent=0
    _
  %s6 = ssub.s32 1, %s4
  %s7 = scalar_select 0, %s6, %s4
  $region1: #{tpu_custom_call.1} parent=0
    #allocation3 [shape = 'u8[8192]{0}', space=vmem, size = 0x2000, scoped, tag = 'input window, operand 0, single buffered']
    #allocation4 [shape = 's32[2]{0}', space=sflag, size = 0x8, scoped, tag = 'scoped memory for tpu_custom_call.1']
    #allocation5 [shape = 's32[2]{0}', space=sflag, size = 0x8, scoped, tag = 'scoped memory for tpu_custom_call.1']
    #allocation6 [shape = 'u8[131072]{0}', space=vmem, size = 0x20000, scoped, tag = 'input window, operand 1']
    #allocation7 [shape = 's32[2]{0}', space=sflag, size = 0x8, scoped, tag = 'scoped memory for tpu_custom_call.1']
    #allocation8 [shape = 'u8[1024]{0}', space=vmem, size = 0x400, scoped, tag = 'input window, operand 2']
    #allocation9 [shape = 'u8[16384]{0}', space=vmem, size = 0x4000, scoped, tag = 'output window, operand 0']
    %8 = vsyncpa [#allocation4], 0
    %9 = vsyncpa [#allocation7], 0
    %s10 = scalar_lea.sflag [#allocation7], 1
    %11 = vsyncpa %s10, 0
    %12 = vsyncpa [#allocation5], 0
    %s13 = scalar_lea.sflag [#allocation5], 1
    %14 = vsyncpa %s13, 0
    loop: start=0, step=1, limit=5
    $region2: #{tpu_custom_call.1} parent=1 // loop_pre_header
      _
    $region3: #{tpu_custom_call.1} parent=1 // loop_header
      %s16 = sphi 0, %s20
      %p17 = scmp.ge.s32.totalorder %s16, 5
      %s23 = sphi 0, %s49
      %s24 = sphi 0, %s45
      %s25 = sphi 0, %s41
      %s26 = sphi 0, %s37
      %s27 = sphi 0, %s23
      %s28 = sphi 0, %s24
      %s29 = sphi 0, %s25
      %s30 = sphi 0, %s26
      %s31 = sphi 0, %s27
      %s32 = sphi 0, %s28
      %s33 = sphi 0, %s29
      %s34 = sphi 0, %s30
      %s54 = sphi 0, %s56
      %s57 = sphi 0, %s54
      %s58 = sphi 0, %s57
      %s74 = sphi 0, %s58
      %s84 = sphi 0, %s86
      %s87 = sphi 0, %s84
      %s88 = sphi 0, %s87
      %s104 = sphi 0, %s88
      %s112 = sphi 0, %s114
      %s115 = sphi 0, %s112
      %s116 = sphi 0, %s115
      %s132 = sphi 0, %s116
      %s142 = sphi 0, %s144
      %s145 = sphi 0, %s142
      %s146 = sphi 0, %s145
      %s162 = sphi 0, %s146
    $region4: #{tpu_custom_call.1} parent=1 // loop_header_branch
      %19 = sbr.rel (%p17) target = $region8
    $region5: #{tpu_custom_call.1} parent=1 // loop_body
      %s21 = ssub.s32 %s16, 1
      %s22 = ssub.s32 %s16, 2
      %s35 = sadd.s32 1, %s26
      %p36 = scmp.ge.s32.totalorder %s35, 1
      %s37 = scalar_select %p36, 0, %s35
      %s38 = sadd.s32 1, %s25
      %s39 = scalar_select %p36, %s38, %s25
      %p40 = scmp.ge.s32.totalorder %s39, 1
      %s41 = scalar_select %p40, 0, %s39
      %s42 = sadd.s32 1, %s24
      %s43 = scalar_select %p40, %s42, %s24
      %p44 = scmp.ge.s32.totalorder %s43, 1
      %s45 = scalar_select %p44, 0, %s43
      %s46 = sadd.s32 1, %s23
      %s47 = scalar_select %p44, %s46, %s23
      %p48 = scmp.ge.s32.totalorder %s47, 3
      %s49 = scalar_select %p48, 0, %s47
      %s50 = ssub.s32 %s24, %s45
      %s51 = ssub.s32 %s26, %s37
      %s52 = sor.u32 %s50, %s51
      %p53 = scmp.eq.s32.totalorder %s52, 0
      %s55 = sadd.s32 %s54, 1
      %s56 = scalar_select %p53, %s54, %s55
      %p59 = pneg %p53
      %p60 = scmp.eq.s32.totalorder %s16, 2
      %p61 = por %p59, %p60
      %p62 = scmp.ne.s32.totalorder %s54, %s57
      %p63 = scmp.eq.s32.totalorder %s16, 0
      %p64 = por %p62, %p63
      %p65 = scmp.ne.s32.totalorder %s54, %s57
      %p66 = scmp.eq.s32.totalorder %s21, 2
      %p67 = por %p65, %p66
      %p68 = scmp.ne.s32.totalorder %s57, %s58
      %p69 = scmp.eq.s32.totalorder %s21, 0
      %p70 = por %p68, %p69
      %p71 = scmp.ne.s32.totalorder %s57, %s58
      %p72 = scmp.eq.s32.totalorder %s22, 2
      %p73 = por %p71, %p72
      %p75 = scmp.ne.s32.totalorder %s58, %s74
      %p76 = scmp.eq.s32.totalorder %s22, 0
      %p77 = por %p75, %p76
      %s78 = ssub.s32 %s23, %s49
      %s79 = ssub.s32 %s26, %s37
      %s80 = sor.u32 %s78, %s79
      %s81 = ssub.s32 %s25, %s41
      %s82 = sor.u32 %s80, %s81
      %p83 = scmp.eq.s32.totalorder %s82, 0
      %s85 = sadd.s32 %s84, 1
      %s86 = scalar_select %p83, %s84, %s85
      %p89 = pneg %p83
      %p90 = scmp.eq.s32.totalorder %s16, 2
      %p91 = por %p89, %p90
      %p92 = scmp.ne.s32.totalorder %s84, %s87
      %p93 = scmp.eq.s32.totalorder %s16, 0
      %p94 = por %p92, %p93
      %p95 = scmp.ne.s32.totalorder %s84, %s87
      %p96 = scmp.eq.s32.totalorder %s21, 2
      %p97 = por %p95, %p96
      %p98 = scmp.ne.s32.totalorder %s87, %s88
      %p99 = scmp.eq.s32.totalorder %s21, 0
      %p100 = por %p98, %p99
      %p101 = scmp.ne.s32.totalorder %s87, %s88
      %p102 = scmp.eq.s32.totalorder %s22, 2
      %p103 = por %p101, %p102
      %p105 = scmp.ne.s32.totalorder %s88, %s104
      %p106 = scmp.eq.s32.totalorder %s22, 0
      %p107 = por %p105, %p106
      %s108 = ssub.s32 %s23, %s49
      %s109 = ssub.s32 %s25, %s41
      %s110 = sor.u32 %s108, %s109
      %p111 = scmp.eq.s32.totalorder %s110, 0
      %s113 = sadd.s32 %s112, 1
      %s114 = scalar_select %p111, %s112, %s113
      %p117 = pneg %p111
      %p118 = scmp.eq.s32.totalorder %s16, 2
      %p119 = por %p117, %p118
      %p120 = scmp.ne.s32.totalorder %s112, %s115
      %p121 = scmp.eq.s32.totalorder %s16, 0
      %p122 = por %p120, %p121
      %p123 = scmp.ne.s32.totalorder %s112, %s115
      %p124 = scmp.eq.s32.totalorder %s21, 2
      %p125 = por %p123, %p124
      %p126 = scmp.ne.s32.totalorder %s115, %s116
      %p127 = scmp.eq.s32.totalorder %s21, 0
      %p128 = por %p126, %p127
      %p129 = scmp.ne.s32.totalorder %s115, %s116
      %p130 = scmp.eq.s32.totalorder %s22, 2
      %p131 = por %p129, %p130
      %p133 = scmp.ne.s32.totalorder %s116, %s132
      %p134 = scmp.eq.s32.totalorder %s22, 0
      %p135 = por %p133, %p134
      %s136 = ssub.s32 %s23, %s49
      %s137 = ssub.s32 %s24, %s45
      %s138 = sor.u32 %s136, %s137
      %s139 = ssub.s32 %s25, %s41
      %s140 = sor.u32 %s138, %s139
      %p141 = scmp.eq.s32.totalorder %s140, 0
      %s143 = sadd.s32 %s142, 1
      %s144 = scalar_select %p141, %s142, %s143
      %p147 = pneg %p141
      %p148 = scmp.eq.s32.totalorder %s16, 2
      %p149 = por %p147, %p148
      %p150 = scmp.ne.s32.totalorder %s142, %s145
      %p151 = scmp.eq.s32.totalorder %s16, 0
      %p152 = por %p150, %p151
      %p153 = scmp.ne.s32.totalorder %s142, %s145
      %p154 = scmp.eq.s32.totalorder %s21, 2
      %p155 = por %p153, %p154
      %p156 = scmp.ne.s32.totalorder %s145, %s146
      %p157 = scmp.eq.s32.totalorder %s21, 0
      %p158 = por %p156, %p157
      %p159 = scmp.ne.s32.totalorder %s145, %s146
      %p160 = scmp.eq.s32.totalorder %s22, 2
      %p161 = por %p159, %p160
      %p163 = scmp.ne.s32.totalorder %s146, %s162
      %p164 = scmp.eq.s32.totalorder %s22, 0
      %p165 = por %p163, %p164
      %p166 = scmp.le.s32.totalorder 1, %s16
      %p167 = scmp.lt.s32.totalorder %s16, 4
      %p168 = pnand %p166, %p167
      %p169 = pneg %p168
      // Predicated region
      $region9: #{tpu_custom_call.1} parent=5 // pred_check
        _
      $region10: #{tpu_custom_call.1} parent=5 // pred_check_branch
        %171 = sbr.rel (%p168) target = $region12
      $region11: #{tpu_custom_call.1} parent=5 // pred_region
        %s172 = ssub.s32 %s16, 1
        // Predicated region
        $region13: #{tpu_custom_call.1} parent=11 // pred_check
          %p173 = pneg %p70
        $region14: #{tpu_custom_call.1} parent=11 // pred_check_branch
          %175 = sbr.rel (%p173) target = $region16
        $region15: #{tpu_custom_call.1} parent=11 // pred_region
          %s176 = smul.u32 2, %s28
          %178 = vsyncadd [#allocation4], 0
          %s179 = sadd.s32 %s30, %s176
          %s180 = smul.addr %s179, 8
          %s181 = scalar_lea.hbm %s0, %s180
          %s182 = sshll.u32 %s181, 4
          %s183 = int_to_ptr.hbm [resolvable:$true] %s182
          %s184 = sshll.u32 [#allocation3], 4
          %s185 = int_to_ptr.vmem [resolvable:$true] %s184
          %190 = dma.hbm_to_vmem [thread:$0]  %s183, 256, %s185, [#allocation4], 128, 128, 8
        $region16: #{tpu_custom_call.1} parent=11 // pred_fallthru
          _
      $region12: #{tpu_custom_call.1} parent=5 // pred_fallthru
        _
      %p191 = scmp.lt.s32.totalorder %s16, 3
      // Predicated region
      $region17: #{tpu_custom_call.1} parent=5 // pred_check
        %p192 = pneg %p191
      $region18: #{tpu_custom_call.1} parent=5 // pred_check_branch
        %194 = sbr.rel (%p192) target = $region20
      $region19: #{tpu_custom_call.1} parent=5 // pred_region
        // Predicated region
        $region21: #{tpu_custom_call.1} parent=19 // pred_check
          %p195 = pneg %p94
        $region22: #{tpu_custom_call.1} parent=19 // pred_check_branch
          %197 = sbr.rel (%p195) target = $region24
        $region23: #{tpu_custom_call.1} parent=19 // pred_region
          %s198 = sand.u32 %s16, 1
          %s199 = scalar_lea.sflag [#allocation7], %s198
          %s200 = sand.u32 %s84, 1
          %s201 = smul.addr %s200, 128
          %s202 = scalar_lea.vmem [#allocation6], %s201
          %s203 = smul.u32 16, %s26
          %205 = vsyncadd %s199, 0
          %s206 = sadd.s32 %s25, %s203
          %s207 = smul.addr %s23, 16
          %s208 = sadd.s32 %s206, %s207
          %s209 = smul.addr %s208, 8
          %s210 = scalar_lea.hbm %s1, %s209
          %s211 = sshll.u32 %s210, 4
          %s212 = int_to_ptr.hbm [resolvable:$true] %s211
          %s213 = sshll.u32 %s202, 4
          %s214 = int_to_ptr.vmem [resolvable:$true] %s213
          %219 = dma.hbm_to_vmem [thread:$0]  %s212, 2048, %s214, %s199, 128, 128, 8
        $region24: #{tpu_custom_call.1} parent=19 // pred_fallthru
          _
        // Predicated region
        $region25: #{tpu_custom_call.1} parent=19 // pred_check
          %p220 = pneg %p122
        $region26: #{tpu_custom_call.1} parent=19 // pred_check_branch
          %222 = sbr.rel (%p220) target = $region28
        $region27: #{tpu_custom_call.1} parent=19 // pred_region
          %s223 = sand.u32 %s16, 1
          %s224 = scalar_lea.sflag [#allocation7], %s223
          %s225 = sand.u32 %s112, 1
          %s226 = scalar_lea.vmem [#allocation8], %s225
          %228 = vsyncadd %s224, 0
          %s229 = sadd.s32 %s25, %s23
          %s230 = scalar_lea.hbm %s2, %s229
          %s232 = sshll.u32 %s230, 4
          %s233 = int_to_ptr.hbm [resolvable:$true] %s232
          %s234 = sshll.u32 %s226, 4
          %s235 = int_to_ptr.vmem [resolvable:$true] %s234
          %237 = dma.hbm_to_vmem [thread:$0]  %s233, 16, %s235, %s224
        $region28: #{tpu_custom_call.1} parent=19 // pred_fallthru
          _
      $region20: #{tpu_custom_call.1} parent=5 // pred_fallthru
        _
      %p238 = scmp.le.s32.totalorder 1, %s16
      %p239 = scmp.lt.s32.totalorder %s16, 4
      %p240 = pnand %p238, %p239
      %p241 = pneg %p240
      // Predicated region
      $region29: #{tpu_custom_call.1} parent=5 // pred_check
        _
      $region30: #{tpu_custom_call.1} parent=5 // pred_check_branch
        %243 = sbr.rel (%p240) target = $region32
      $region31: #{tpu_custom_call.1} parent=5 // pred_region
        %s244 = ssub.s32 %s16, 1
        // Predicated region
        $region33: #{tpu_custom_call.1} parent=31 // pred_check
          %p245 = pneg %p70
        $region34: #{tpu_custom_call.1} parent=31 // pred_check_branch
          %247 = sbr.rel (%p245) target = $region36
        $region35: #{tpu_custom_call.1} parent=31 // pred_region
          %249 = dma.done [#allocation4], 256
        $region36: #{tpu_custom_call.1} parent=31 // pred_fallthru
          _
        %s250 = sand.u32 %s21, 1
        %s251 = scalar_lea.sflag [#allocation7], %s250
        %s252 = sand.u32 %s87, 1
        %s253 = smul.addr %s252, 128
        %s254 = scalar_lea.vmem [#allocation6], %s253
        // Predicated region
        $region37: #{tpu_custom_call.1} parent=31 // pred_check
          %p255 = pneg %p100
        $region38: #{tpu_custom_call.1} parent=31 // pred_check_branch
          %257 = sbr.rel (%p255) target = $region40
        $region39: #{tpu_custom_call.1} parent=31 // pred_region
          %259 = dma.done %s251, 2048
        $region40: #{tpu_custom_call.1} parent=31 // pred_fallthru
          _
        %s260 = sand.u32 %s21, 1
        %s261 = scalar_lea.sflag [#allocation7], %s260
        %s262 = sand.u32 %s115, 1
        %s263 = scalar_lea.vmem [#allocation8], %s262
        // Predicated region
        $region41: #{tpu_custom_call.1} parent=31 // pred_check
          %p264 = pneg %p128
        $region42: #{tpu_custom_call.1} parent=31 // pred_check_branch
          %266 = sbr.rel (%p264) target = $region44
        $region43: #{tpu_custom_call.1} parent=31 // pred_region
          %268 = dma.done %s261, 16
        $region44: #{tpu_custom_call.1} parent=31 // pred_fallthru
          _
        %p269 = pneg %p70
        %p270 = pneg %p67
        %s271 = sand.u32 %s21, 1
        %s272 = scalar_lea.sflag [#allocation7], %s271
        %s273 = sand.u32 %s87, 1
        %s274 = smul.addr %s273, 128
        %s275 = scalar_lea.vmem [#allocation6], %s274
        %p276 = pneg %p100
        %p277 = pneg %p97
        %s278 = sand.u32 %s21, 1
        %s279 = scalar_lea.sflag [#allocation7], %s278
        %s280 = sand.u32 %s115, 1
        %s281 = scalar_lea.vmem [#allocation8], %s280
        %p282 = pneg %p128
        %p283 = pneg %p125
        %p284 = pneg %p158
        %p285 = pneg %p155
        %s286 = sand.u32 %s145, 1
        %s287 = scalar_lea.sflag [#allocation5], %s286
        %s288 = sand.u32 %s145, 1
        %s289 = smul.addr %s288, 16
        %s290 = scalar_lea.vmem [#allocation9], %s289
        %s291 = smul.u32 2, %s28
        %s292 = smul.u32 16, %s30
        %s293 = smul.u32 2, %s28
        %p294 = scmp.eq.s32.totalorder %s30, 0
        // Predicated region
        $region45: #{tpu_custom_call.1} parent=31 // pred_check
          %p295 = pneg %p294
        $region46: #{tpu_custom_call.1} parent=31 // pred_check_branch
          %297 = sbr.rel (%p295) target = $region48
        $region47: #{tpu_custom_call.1} parent=31 // pred_region
          %298 = vst [vmem:[#allocation2] sm:$0xff] 0.0
          %299 = vst [vmem:[#allocation2 + $0x8] sm:$0xff] 0.0
        $region48: #{tpu_custom_call.1} parent=31 // pred_fallthru
          _
        %v300 = vld [vmem:[#allocation2] sm:$0xff]
        %v301 = vld [vmem:[#allocation2 + $0x8] sm:$0xff]
        %v302 = vld [vmem:[#allocation3] sm:$0xff]
        %v303 = vld [vmem:[#allocation3 + $0x8] sm:$0xff]
        %v304 = vld [vmem:[%s254] sm:$0xff]
        %v305 = vld [vmem:[%s254 + $0x8] sm:$0xff]
        %v306 = vld [vmem:[%s254 + $0x10] sm:$0xff]
        %v307 = vld [vmem:[%s254 + $0x18] sm:$0xff]
        %v308 = vld [vmem:[%s254 + $0x20] sm:$0xff]
        %v309 = vld [vmem:[%s254 + $0x28] sm:$0xff]
        %v310 = vld [vmem:[%s254 + $0x30] sm:$0xff]
        %v311 = vld [vmem:[%s254 + $0x38] sm:$0xff]
        %v312 = vld [vmem:[%s254 + $0x40] sm:$0xff]
        %v313 = vld [vmem:[%s254 + $0x48] sm:$0xff]
        %v314 = vld [vmem:[%s254 + $0x50] sm:$0xff]
        %v315 = vld [vmem:[%s254 + $0x58] sm:$0xff]
        %v316 = vld [vmem:[%s254 + $0x60] sm:$0xff]
        %v317 = vld [vmem:[%s254 + $0x68] sm:$0xff]
        %v318 = vld [vmem:[%s254 + $0x70] sm:$0xff]
        %v319 = vld [vmem:[%s254 + $0x78] sm:$0xff]
        %320 = vmatpush.msra.mxu0 %v319
        %321 = vmatpush.msra.mxu0 %v318
        %322 = vmatpush.msra.mxu0 %v317
        %323 = vmatpush.msra.mxu0 %v316
        %324 = vmatpush.msra.mxu0 %v315
        %325 = vmatpush.msra.mxu0 %v314
        %326 = vmatpush.msra.mxu0 %v313
        %327 = vmatpush.msra.mxu0 %v312
        %328 = vmatpush.msra.mxu0 %v311
        %329 = vmatpush.msra.mxu0 %v310
        %330 = vmatpush.msra.mxu0 %v309
        %331 = vmatpush.msra.mxu0 %v308
        %332 = vmatpush.msra.mxu0 %v307
        %333 = vmatpush.msra.mxu0 %v306
        %334 = vmatpush.msra.mxu0 %v305
        %335 = vmatpush.msra.mxu0 %v304
        %336 = vmatmul.f32.gmra.mxu0 %v302
        %v337 = vpop.f32.mrf.mxu0
        %v338 = vadd.f32 0.0, %v337
        %339 = vmatmul.f32.gmra.mxu0 %v303
        %v340 = vpop.f32.mrf.mxu0
        %v341 = vadd.f32 0.0, %v340
        %342 = vdwg.mxu0
        %v343 = vadd.f32 %v300, %v338
        %v344 = vadd.f32 %v301, %v341
        %345 = vst [vmem:[#allocation2] sm:$0xff] %v343
        %346 = vst [vmem:[#allocation2 + $0x8] sm:$0xff] %v344
        // Predicated region
        $region49: #{tpu_custom_call.1} parent=31 // pred_check
          %p347 = pneg %p294
        $region50: #{tpu_custom_call.1} parent=31 // pred_check_branch
          %349 = sbr.rel (%p347) target = $region52
        $region51: #{tpu_custom_call.1} parent=31 // pred_region
          %v350 = vld [vmem:[#allocation2] sm:$0xff]
          %v351 = vld [vmem:[#allocation2 + $0x8] sm:$0xff]
          %v352 = vld [vmem:[%s263] sm:$0x1]
          %v354 = vperm.slane %v352, 0
          %v356 = vadd.f32 %v350, %v354
          %v357 = vadd.f32 %v351, %v354
          %358 = vst [vmem:[%s290] sm:$0xff] %v356
          %359 = vst [vmem:[%s290 + $0x8] sm:$0xff] %v357
        $region52: #{tpu_custom_call.1} parent=31 // pred_fallthru
          _
        %s360 = sand.u32 %s145, 1
        %s361 = scalar_lea.sflag [#allocation5], %s360
        %s362 = sand.u32 %s145, 1
        %s363 = smul.addr %s362, 16
        %s364 = scalar_lea.vmem [#allocation9], %s363
        // Predicated region
        $region53: #{tpu_custom_call.1} parent=31 // pred_check
          %p365 = pneg %p155
        $region54: #{tpu_custom_call.1} parent=31 // pred_check_branch
          %367 = sbr.rel (%p365) target = $region56
        $region55: #{tpu_custom_call.1} parent=31 // pred_region
          %s368 = smul.u32 2, %s28
          %370 = vsyncadd %s361, 0
          %s371 = sadd.s32 %s29, %s368
          %s372 = smul.addr %s27, 2
          %s373 = sadd.s32 %s371, %s372
          %s374 = smul.addr %s373, 8
          %s375 = scalar_lea.hbm %s3, %s374
          %s376 = sshll.u32 %s364, 4
          %s377 = int_to_ptr.vmem [resolvable:$true] %s376
          %s378 = sshll.u32 %s375, 4
          %s379 = int_to_ptr.hbm [resolvable:$true] %s378
          %384 = dma.vmem_to_hbm [thread:$0]  %s377, 256, %s379, %s361, 128, 128, 8
        $region56: #{tpu_custom_call.1} parent=31 // pred_fallthru
          _
      $region32: #{tpu_custom_call.1} parent=5 // pred_fallthru
        _
      %p385 = scmp.le.s32.totalorder 2, %s16
      // Predicated region
      $region57: #{tpu_custom_call.1} parent=5 // pred_check
        %p386 = pneg %p385
      $region58: #{tpu_custom_call.1} parent=5 // pred_check_branch
        %388 = sbr.rel (%p386) target = $region60
      $region59: #{tpu_custom_call.1} parent=5 // pred_region
        %s389 = ssub.s32 %s16, 2
        // Predicated region
        $region61: #{tpu_custom_call.1} parent=59 // pred_check
          %p390 = pneg %p161
        $region62: #{tpu_custom_call.1} parent=59 // pred_check_branch
          %392 = sbr.rel (%p390) target = $region64
        $region63: #{tpu_custom_call.1} parent=59 // pred_region
          %s393 = sand.u32 %s146, 1
          %s394 = scalar_lea.sflag [#allocation5], %s393
          %s395 = sand.u32 %s146, 1
          %s396 = smul.addr %s395, 16
          %s397 = scalar_lea.vmem [#allocation9], %s396
          %399 = dma.done %s394, 256
        $region64: #{tpu_custom_call.1} parent=59 // pred_fallthru
          _
      $region60: #{tpu_custom_call.1} parent=5 // pred_fallthru
        _
    $region6: #{tpu_custom_call.1} parent=1 // loop_footer
      %s20 = sadd.s32 1, %s16
    $region7: #{tpu_custom_call.1} parent=1 // loop_footer_branch
      %15 = sbr.rel target = $region3
    $region8: #{tpu_custom_call.1} parent=1 // loop_exit
      _
    %400 = vsyncpa [#allocation4], 1
    %s401 = scalar_lea.sflag [#allocation4], 1
    %402 = vsyncpa %s401, 1
    %403 = vsyncpa [#allocation7], 1
    %s404 = scalar_lea.sflag [#allocation7], 1
    %405 = vsyncpa %s404, 1
    %406 = vsyncpa [#allocation5], 1
    %s407 = scalar_lea.sflag [#allocation5], 1
    %408 = vsyncpa %s407, 1

</llo_original>
